<compile_context>
chip_gen: v6e
topology: v6e:2x2x1
jax: 0.10.0
libtpu: 0.0.40
codegen_flags: <defaults>
</compile_context>

<pallas_src>
import jax
import jax.numpy as jnp
from jax import lax
from jax.experimental import pallas as pl
from jax.experimental.pallas import tpu as pltpu

_CHUNK = 128   # rows per in-kernel sub-chunk (keeps h = (rows,384) f32 <= 48 vregs)
_H = 384       # hidden width of the projection layer


def _round_up(v, m):
    return ((v + m - 1) // m) * m


def _pick_tile(B, dim_in, itemsize, tm_cap):
    """Batch tile: as large as the VMEM budget allows, always a multiple of 8,
    and sized so the grid has >= 2 steps (v7x has 2 TensorCores)."""
    if B <= 8:
        return B
    # Double-buffered x tile dominates VMEM; stay well under the smallest
    # default scoped-VMEM limit (16 MiB on v5e) so no flag override is needed.
    budget = 12 << 20
    cap_vmem = max(8, (budget // (2 * dim_in * itemsize)) // 8 * 8)
    cap = min(tm_cap, cap_vmem)
    tm = min(cap, _round_up((B + 1) // 2, 8))          # >= 2 grid steps
    if tm > _CHUNK:                                    # inner loop needs _CHUNK | tm
        tm_up = _round_up(tm, _CHUNK)
        tm = tm_up if tm_up <= B else (tm // _CHUNK) * _CHUNK
    return tm


def head_kernel(x_ref, gx_ref, w1x_ref, w1g_ref, b1_ref, w2_ref, b2_ref, out_ref):
    # x_ref: (tm, dim_in), gx_ref: (tm, 2), w1x: (dim_in, H), w1g: (2, H),
    # b1: (1, H), w2: (1, H), b2: SMEM (1,), out_ref: (1, 1, tm)
    tm = x_ref.shape[0]
    rows = min(tm, _CHUNK)
    n_chunks = tm // rows
    b2 = b2_ref[0]

    def chunk(off):
        xc = x_ref[pl.ds(off, rows), :]
        gc = gx_ref[pl.ds(off, rows), :]
        # Main projection on the MXU, accumulated in f32.
        h = jnp.dot(xc, w1x_ref[...], preferred_element_type=jnp.float32)
        # gx (2 concatenated features): two VPU broadcast-FMAs, not a K=2 matmul.
        h = h + gc[:, 0:1] * w1g_ref[0:1, :]
        h = h + gc[:, 1:2] * w1g_ref[1:2, :]
        h = h + b1_ref[...]
        # Sigmoid as a single EUP op (tanh); exact, no overflow for large |h|.
        h = 0.5 * jnp.tanh(0.5 * h) + 0.5
        # (384 -> 1) head, emitted lane-dense: (1,H) . (rows,H)^T -> (1, rows).
        row = lax.dot_general(w2_ref[...], h, (((1,), (1,)), ((), ())),
                              preferred_element_type=jnp.float32) + b2
        out_ref[:, :, pl.ds(off, rows)] = row.reshape(1, 1, rows)

    if n_chunks == 1:
        chunk(0)
    elif n_chunks <= 8:
        for c in range(n_chunks):          # fully unrolled, static aligned offsets
            chunk(c * rows)
    else:
        @pl.loop(0, n_chunks)
        def _(c):
            chunk(pl.multiple_of(c * rows, rows))


def transformer_basic_head(x, gx, w1, b1, w2, b2, *, tm=None, tm_cap=4096):
    """x: (B, dim_in), gx: (B, 2) -> (B, 1) float32.

    w1: (dim_in + 2, 384) pre-transposed PyTorch weight, b1: (384,)
    w2: (384, 1), b2: (1,)
    """
    B, dim_in = x.shape
    H = w1.shape[1]
    assert w1.shape == (dim_in + 2, H) and gx.shape == (B, 2)

    itemsize = jnp.dtype(x.dtype).itemsize
    if tm is None:
        tm = _pick_tile(B, dim_in, itemsize, tm_cap)
    else:
        tm = min(int(tm), B)
        if B <= 8:
            tm = B
        else:
            tm = max(8, (tm // 8) * 8)
            if tm > _CHUNK:
                tm = (tm // _CHUNK) * _CHUNK
    n_tiles = pl.cdiv(B, tm)

    # Split W1 so the (B, dim_in + 2) concat is never materialized in HBM;
    # the main-matmul weight matches x's dtype (no wrapper pass over x itself).
    w1x = w1[:dim_in].astype(x.dtype)
    w1g = w1[dim_in:].astype(jnp.float32)
    gx_f = gx.astype(jnp.float32)
    b1_2d = b1.reshape(1, H).astype(jnp.float32)
    w2_row = w2.reshape(1, H).astype(jnp.float32)     # (384,1) column -> (1,384) row
    b2_1d = b2.reshape(1).astype(jnp.float32)

    flops = 2 * B * (dim_in + 2) * H + 2 * B * H
    transcendentals = B * H
    bytes_accessed = int(B * dim_in * itemsize + B * 2 * 4
                         + (dim_in + 2) * H * 4 + 2 * H * 4 + 4 + B * 4)

    out3 = pl.pallas_call(
        head_kernel,
        out_shape=jax.ShapeDtypeStruct((n_tiles, 1, tm), jnp.float32),
        grid=(n_tiles,),
        in_specs=[
            pl.BlockSpec((tm, dim_in), lambda i: (i, 0)),       # x tile (pipelined)
            pl.BlockSpec((tm, 2), lambda i: (i, 0)),            # gx tile (pipelined)
            pl.BlockSpec((dim_in, H), lambda i: (0, 0)),        # W1[:dim_in], resident
            pl.BlockSpec((2, H), lambda i: (0, 0)),             # W1[dim_in:], resident
            pl.BlockSpec((1, H), lambda i: (0, 0)),             # b1, resident
            pl.BlockSpec((1, H), lambda i: (0, 0)),             # W2 row, resident
            pl.BlockSpec(memory_space=pltpu.MemorySpace.SMEM),  # b2 scalar in SMEM
        ],
        out_specs=pl.BlockSpec((1, 1, tm), lambda i: (i, 0, 0)),  # lane-dense rows
        compiler_params=pltpu.CompilerParams(
            dimension_semantics=("parallel",)),
        cost_estimate=pl.CostEstimate(
            flops=flops, transcendentals=transcendentals,
            bytes_accessed=bytes_accessed),
    )(x, gx_f, w1x, w1g, b1_2d, w2_row, b2_1d)

    # (n_tiles, 1, tm) lane-dense rows -> (B, 1) column; trailing garbage rows
    # (from the padded final tile) are sliced off here.
    return out3.reshape(n_tiles * tm)[:B].reshape(B, 1)


def init_params(key, dim_in):
    """Deterministic PyTorch-style (kaiming-uniform-ish) Linear init."""
    k1, k2, k3, k4 = jax.random.split(key, 4)
    fan1 = dim_in + 2
    bound1 = 1.0 / (fan1 ** 0.5)
    # stored as (in, out) = transposed PyTorch weight
    w1 = jax.random.uniform(k1, (fan1, _H), jnp.float32, -bound1, bound1)
    b1 = jax.random.uniform(k2, (_H,), jnp.float32, -bound1, bound1)
    bound2 = 1.0 / (_H ** 0.5)
    w2 = jax.random.uniform(k3, (_H, 1), jnp.float32, -bound2, bound2)
    b2 = jax.random.uniform(k4, (1,), jnp.float32, -bound2, bound2)
    return w1, b1, w2, b2


if __name__ == "__main__":
    key = jax.random.PRNGKey(0)
    kx, kg, kp = jax.random.split(key, 3)

    # Small, ragged batch: 2 grid steps (tm=104), partial final tile.
    B, dim_in = 200, 32
    x = jax.random.normal(kx, (B, dim_in), jnp.float32)
    gx = jax.random.normal(kg, (B, 2), jnp.float32)
    w1, b1, w2, b2 = init_params(kp, dim_in)

    # Pure-JAX reference (PyTorch forward semantics, inference mode).
    xg = jnp.concatenate([x, gx], axis=1)
    ref = jax.nn.sigmoid(xg @ w1 + b1) @ w2 + b2

    out = jax.block_until_ready(transformer_basic_head(x, gx, w1, b1, w2, b2))
    assert out.shape == (B, 1)
    assert jnp.allclose(out, ref, atol=5e-3, rtol=5e-3), "mismatch vs reference"

    # Bigger ragged batch with an explicit 384-row tile: exercises the in-kernel
    # 128-row sub-chunk loop and a partially out-of-bounds (masked) final tile.
    B2 = 650
    x2 = jax.random.normal(kx, (B2, dim_in), jnp.float32)
    gx2 = jax.random.normal(kg, (B2, 2), jnp.float32)
    ref2 = jax.nn.sigmoid(jnp.concatenate([x2, gx2], axis=1) @ w1 + b1) @ w2 + b2
    out2 = jax.block_until_ready(
        transformer_basic_head(x2, gx2, w1, b1, w2, b2, tm=384))
    assert out2.shape == (B2, 1)
    assert jnp.allclose(out2, ref2, atol=5e-3, rtol=5e-3), "mismatch vs reference (chunked)"

    print("KERNEL_OK")
</pallas_src>

<mosaic_0001>
module attributes {stable_mosaic.version = 11 : i64} {
  func.func @head_kernel(%arg0: i32, %arg1: memref<104x32xf32, #tpu.memory_space<vmem>>, %arg2: memref<104x2xf32, #tpu.memory_space<vmem>>, %arg3: memref<32x384xf32, #tpu.memory_space<vmem>>, %arg4: memref<2x384xf32, #tpu.memory_space<vmem>>, %arg5: memref<1x384xf32, #tpu.memory_space<vmem>>, %arg6: memref<1x384xf32, #tpu.memory_space<vmem>>, %arg7: memref<1xf32, #tpu.memory_space<smem>>, %arg8: memref<1x1x104xf32, #tpu.memory_space<vmem>>) attributes {dimension_semantics = [#tpu.dimension_semantics<parallel>], iteration_bounds = array<i64: 2>, scalar_prefetch = 0 : i64, scratch_operands = 0 : i64, tpu.core_type = #tpu.core_type<tc>, window_params = [{transform_indices = @transform_0, window_bounds = array<i64: 104, 32>}, {transform_indices = @transform_1, window_bounds = array<i64: 104, 2>}, {pipeline_mode = #tpu.pipeline_mode<synchronous>, transform_indices = @transform_2, window_bounds = array<i64: 32, 384>}, {pipeline_mode = #tpu.pipeline_mode<synchronous>, transform_indices = @transform_3, window_bounds = array<i64: 2, 384>}, {pipeline_mode = #tpu.pipeline_mode<synchronous>, transform_indices = @transform_4, window_bounds = array<i64: 1, 384>}, {pipeline_mode = #tpu.pipeline_mode<synchronous>, transform_indices = @transform_5, window_bounds = array<i64: 1, 384>}, {transform_indices = @transform_6, window_bounds = array<i64: 1>}, {transform_indices = @transform_7, window_bounds = array<i64: 1, 1, 104>}]} {
    %c0 = arith.constant 0 : index
    %0 = memref.load %arg7[%c0] : memref<1xf32, #tpu.memory_space<smem>>
    %c0_0 = arith.constant 0 : index
    %c0_1 = arith.constant 0 : index
    %1 = vector.load %arg1[%c0_0, %c0_1] : memref<104x32xf32, #tpu.memory_space<vmem>>, vector<104x32xf32>
    %c0_2 = arith.constant 0 : index
    %c0_3 = arith.constant 0 : index
    %2 = vector.load %arg2[%c0_2, %c0_3] : memref<104x2xf32, #tpu.memory_space<vmem>>, vector<104x2xf32>
    %c0_4 = arith.constant 0 : index
    %c0_5 = arith.constant 0 : index
    %3 = vector.load %arg3[%c0_4, %c0_5] : memref<32x384xf32, #tpu.memory_space<vmem>>, vector<32x384xf32>
    %cst = arith.constant dense<0.000000e+00> : vector<104x384xf32>
    %4 = tpu.matmul %1, %3, %cst {dimension_numbers = #tpu.dot_dimension_numbers<[1], [0], [0], [1], [0, 0, 1, 1], [], []>} : vector<104x32xf32>, vector<32x384xf32>, vector<104x384xf32> -> vector<104x384xf32>
    %5 = vector.extract_strided_slice %2 {offsets = [0, 0], sizes = [104, 1], strides = [1, 1]} : vector<104x2xf32> to vector<104x1xf32>
    %c0_6 = arith.constant 0 : index
    %c0_7 = arith.constant 0 : index
    %6 = vector.load %arg4[%c0_6, %c0_7] : memref<2x384xf32, #tpu.memory_space<vmem>>, vector<1x384xf32>
    %7 = vector.broadcast %5 : vector<104x1xf32> to vector<104x384xf32>
    %8 = vector.broadcast %6 : vector<1x384xf32> to vector<104x384xf32>
    %9 = arith.mulf %7, %8 : vector<104x384xf32>
    %10 = arith.addf %4, %9 : vector<104x384xf32>
    %11 = vector.extract_strided_slice %2 {offsets = [0, 1], sizes = [104, 1], strides = [1, 1]} : vector<104x2xf32> to vector<104x1xf32>
    %c1 = arith.constant 1 : index
    %c0_8 = arith.constant 0 : index
    %12 = vector.load %arg4[%c1, %c0_8] : memref<2x384xf32, #tpu.memory_space<vmem>>, vector<1x384xf32>
    %13 = vector.broadcast %11 : vector<104x1xf32> to vector<104x384xf32>
    %14 = vector.broadcast %12 : vector<1x384xf32> to vector<104x384xf32>
    %15 = arith.mulf %13, %14 : vector<104x384xf32>
    %16 = arith.addf %10, %15 : vector<104x384xf32>
    %c0_9 = arith.constant 0 : index
    %c0_10 = arith.constant 0 : index
    %17 = vector.load %arg5[%c0_9, %c0_10] : memref<1x384xf32, #tpu.memory_space<vmem>>, vector<1x384xf32>
    %18 = vector.broadcast %17 : vector<1x384xf32> to vector<104x384xf32>
    %19 = arith.addf %16, %18 : vector<104x384xf32>
    %cst_11 = arith.constant 5.000000e-01 : f32
    %20 = vector.broadcast %cst_11 : f32 to vector<104x384xf32>
    %21 = arith.mulf %20, %19 : vector<104x384xf32>
    %22 = math.tanh %21 : vector<104x384xf32>
    %cst_12 = arith.constant 5.000000e-01 : f32
    %23 = vector.broadcast %cst_12 : f32 to vector<104x384xf32>
    %24 = arith.mulf %23, %22 : vector<104x384xf32>
    %cst_13 = arith.constant 5.000000e-01 : f32
    %25 = vector.broadcast %cst_13 : f32 to vector<104x384xf32>
    %26 = arith.addf %24, %25 : vector<104x384xf32>
    %c0_14 = arith.constant 0 : index
    %c0_15 = arith.constant 0 : index
    %27 = vector.load %arg6[%c0_14, %c0_15] : memref<1x384xf32, #tpu.memory_space<vmem>>, vector<1x384xf32>
    %cst_16 = arith.constant dense<0.000000e+00> : vector<1x104xf32>
    %28 = tpu.matmul %27, %26, %cst_16 {dimension_numbers = #tpu.dot_dimension_numbers<[1], [1], [0], [0], [0, 0, 1, 0], [], []>} : vector<1x384xf32>, vector<104x384xf32>, vector<1x104xf32> -> vector<1x104xf32>
    %29 = vector.broadcast %0 : f32 to vector<1x104xf32>
    %30 = arith.addf %28, %29 : vector<1x104xf32>
    %31 = vector.shape_cast %30 : vector<1x104xf32> to vector<1x1x104xf32>
    %c0_17 = arith.constant 0 : index
    %c0_18 = arith.constant 0 : index
    %c0_19 = arith.constant 0 : index
    %32 = vector.load %arg8[%c0_17, %c0_18, %c0_19] : memref<1x1x104xf32, #tpu.memory_space<vmem>>, vector<1x1x104xf32>
    tpu.vector_store %arg8[%c0_17, %c0_18, %c0_19], %31 {strides = array<i32>} : memref<1x1x104xf32, #tpu.memory_space<vmem>>, vector<1x1x104xf32>,
    return
  }
  func.func @transform_0(%arg0: i32) -> (i32, i32) {
    %c0_i32 = arith.constant 0 : i32
    %c0_i32_0 = arith.constant 0 : i32
    return %arg0, %c0_i32 : i32, i32
  }
  func.func @transform_1(%arg0: i32) -> (i32, i32) {
    %c0_i32 = arith.constant 0 : i32
    %c0_i32_0 = arith.constant 0 : i32
    return %arg0, %c0_i32 : i32, i32
  }
  func.func @transform_2(%arg0: i32) -> (i32, i32) {
    %c0_i32 = arith.constant 0 : i32
    %c0_i32_0 = arith.constant 0 : i32
    %c0_i32_1 = arith.constant 0 : i32
    return %c0_i32, %c0_i32_0 : i32, i32
  }
  func.func @transform_3(%arg0: i32) -> (i32, i32) {
    %c0_i32 = arith.constant 0 : i32
    %c0_i32_0 = arith.constant 0 : i32
    %c0_i32_1 = arith.constant 0 : i32
    return %c0_i32, %c0_i32_0 : i32, i32
  }
  func.func @transform_4(%arg0: i32) -> (i32, i32) {
    %c0_i32 = arith.constant 0 : i32
    %c0_i32_0 = arith.constant 0 : i32
    %c0_i32_1 = arith.constant 0 : i32
    return %c0_i32, %c0_i32_0 : i32, i32
  }
  func.func @transform_5(%arg0: i32) -> (i32, i32) {
    %c0_i32 = arith.constant 0 : i32
    %c0_i32_0 = arith.constant 0 : i32
    %c0_i32_1 = arith.constant 0 : i32
    return %c0_i32, %c0_i32_0 : i32, i32
  }
  func.func @transform_6(%arg0: i32) -> i32 {
    %c0_i32 = arith.constant 0 : i32
    %c0_i32_0 = arith.constant 0 : i32
    return %c0_i32 : i32
  }
  func.func @transform_7(%arg0: i32) -> (i32, i32, i32) {
    %c0_i32 = arith.constant 0 : i32
    %c0_i32_0 = arith.constant 0 : i32
    %c0_i32_1 = arith.constant 0 : i32
    return %arg0, %c0_i32, %c0_i32_0 : i32, i32, i32
  }
}

</mosaic_0001>

<llo_original>
// kernel: tpu_custom_call.1
$region0: #{tpu_custom_call.1}
  #allocation0 [shape = 'u32[]', space=smem, size = 0x4, offset = 0x4, fixed_abs, tag = 'smem constant byte address 0x4 - core index']
  #allocation1 [shape = 'u32[144,128]{1,0:T(1,128)}', space=vmem, size = 0x12000, scoped, tag = 'internal scratch']
  #allocation2 [shape = 'f32[1]{0:T(128)S(6)}', space=smem, size = 0x200, scoped, tag = 'scoped memory for tpu_custom_call.1']
  %s0 = inlined_call_operand.vmem [shape: f32[200,32], index: 0, kind: input, shape index: {}]
  %s1 = inlined_call_operand.vmem [shape: f32[200,2], index: 1, kind: input, shape index: {}]
  %s2 = inlined_call_operand.vmem [shape: f32[32,384], index: 2, kind: input, shape index: {}]
  %s3 = inlined_call_operand.vmem [shape: f32[2,384], index: 3, kind: input, shape index: {}]
  %s4 = inlined_call_operand.vmem [shape: f32[1,384], index: 4, kind: input, shape index: {}]
  %s5 = inlined_call_operand.vmem [shape: f32[1,384], index: 5, kind: input, shape index: {}]
  %s6 = inlined_call_operand.<no memory space> [shape: f32[1], index: 6, kind: input, shape index: {}]
  %s7 = inlined_call_operand.hbm [shape: f32[2,1,104], index: 7, kind: output, shape index: {}]
  %s8 = sld [smem:[#allocation0]]
  $region61: #{tpu_custom_call.1} parent=0
    _
  %s10 = ssub.s32 1, %s8
  %s11 = scalar_select 0, %s10, %s8
  %12 = sst [smem:[#allocation2]] %s6
  $region1: #{tpu_custom_call.1} parent=0
    #allocation3 [shape = 'u8[1024]{0}', space=vmem, size = 0x400, scoped, tag = 'output window, operand 0']
    #allocation4 [shape = 's32[2]{0}', space=sflag, size = 0x8, scoped, tag = 'scoped memory for tpu_custom_call.1']
    %13 = vsyncpa [#allocation4], 0
    %s14 = scalar_lea.sflag [#allocation4], 1
    %15 = vsyncpa %s14, 0
    loop: start=0, step=1, limit=4
    $region2: #{tpu_custom_call.1} parent=1 // loop_pre_header
      _
    $region3: #{tpu_custom_call.1} parent=1 // loop_header
      %s17 = sphi 0, %s21
      %p18 = scmp.ge.s32.totalorder %s17, 4
      %s27 = sphi 0, %s29
      %s30 = sphi 0, %s27
      %s31 = sphi 0, %s30
      %s47 = sphi 0, %s31
      %s53 = sphi 0, %s55
      %s56 = sphi 0, %s53
      %s57 = sphi 0, %s56
      %s73 = sphi 0, %s57
      %s77 = sphi 0, %s77
      %s79 = sphi 0, %s77
      %s80 = sphi 0, %s79
      %s94 = sphi 0, %s80
      %s98 = sphi 0, %s98
      %s100 = sphi 0, %s98
      %s101 = sphi 0, %s100
      %s115 = sphi 0, %s101
      %s119 = sphi 0, %s119
      %s121 = sphi 0, %s119
      %s122 = sphi 0, %s121
      %s136 = sphi 0, %s122
      %s140 = sphi 0, %s140
      %s142 = sphi 0, %s140
      %s143 = sphi 0, %s142
      %s157 = sphi 0, %s143
      %s161 = sphi 0, %s161
      %s163 = sphi 0, %s161
      %s164 = sphi 0, %s163
      %s178 = sphi 0, %s164
      %s184 = sphi 0, %s186
      %s187 = sphi 0, %s184
      %s188 = sphi 0, %s187
      %s204 = sphi 0, %s188
    $region4: #{tpu_custom_call.1} parent=1 // loop_header_branch
      %20 = sbr.rel (%p18) target = $region8
    $region5: #{tpu_custom_call.1} parent=1 // loop_body
      %s22 = ssub.s32 %s17, 1
      %s23 = ssub.s32 %s17, 2
      %s24 = sadd.s32 %s17, 1
      %s25 = ssub.s32 %s17, %s24
      %p26 = scmp.eq.s32.totalorder %s25, 0
      %s28 = sadd.s32 %s27, 1
      %s29 = scalar_select %p26, %s27, %s28
      %p32 = pneg %p26
      %p33 = scmp.eq.s32.totalorder %s17, 1
      %p34 = por %p32, %p33
      %p35 = scmp.ne.s32.totalorder %s27, %s30
      %p36 = scmp.eq.s32.totalorder %s17, 0
      %p37 = por %p35, %p36
      %p38 = scmp.ne.s32.totalorder %s27, %s30
      %p39 = scmp.eq.s32.totalorder %s22, 1
      %p40 = por %p38, %p39
      %p41 = scmp.ne.s32.totalorder %s30, %s31
      %p42 = scmp.eq.s32.totalorder %s22, 0
      %p43 = por %p41, %p42
      %p44 = scmp.ne.s32.totalorder %s30, %s31
      %p45 = scmp.eq.s32.totalorder %s23, 1
      %p46 = por %p44, %p45
      %p48 = scmp.ne.s32.totalorder %s31, %s47
      %p49 = scmp.eq.s32.totalorder %s23, 0
      %p50 = por %p48, %p49
      %s51 = ssub.s32 %s17, %s24
      %p52 = scmp.eq.s32.totalorder %s51, 0
      %s54 = sadd.s32 %s53, 1
      %s55 = scalar_select %p52, %s53, %s54
      %p58 = pneg %p52
      %p59 = scmp.eq.s32.totalorder %s17, 1
      %p60 = por %p58, %p59
      %p61 = scmp.ne.s32.totalorder %s53, %s56
      %p62 = scmp.eq.s32.totalorder %s17, 0
      %p63 = por %p61, %p62
      %p64 = scmp.ne.s32.totalorder %s53, %s56
      %p65 = scmp.eq.s32.totalorder %s22, 1
      %p66 = por %p64, %p65
      %p67 = scmp.ne.s32.totalorder %s56, %s57
      %p68 = scmp.eq.s32.totalorder %s22, 0
      %p69 = por %p67, %p68
      %p70 = scmp.ne.s32.totalorder %s56, %s57
      %p71 = scmp.eq.s32.totalorder %s23, 1
      %p72 = por %p70, %p71
      %p74 = scmp.ne.s32.totalorder %s57, %s73
      %p75 = scmp.eq.s32.totalorder %s23, 0
      %p76 = por %p74, %p75
      %s78 = sadd.s32 %s77, 1
      %p81 = scmp.eq.s32.totalorder %s17, 1
      %p82 = scmp.ne.s32.totalorder %s77, %s79
      %p83 = scmp.eq.s32.totalorder %s17, 0
      %p84 = por %p82, %p83
      %p85 = scmp.ne.s32.totalorder %s77, %s79
      %p86 = scmp.eq.s32.totalorder %s22, 1
      %p87 = por %p85, %p86
      %p88 = scmp.ne.s32.totalorder %s79, %s80
      %p89 = scmp.eq.s32.totalorder %s22, 0
      %p90 = por %p88, %p89
      %p91 = scmp.ne.s32.totalorder %s79, %s80
      %p92 = scmp.eq.s32.totalorder %s23, 1
      %p93 = por %p91, %p92
      %p95 = scmp.ne.s32.totalorder %s80, %s94
      %p96 = scmp.eq.s32.totalorder %s23, 0
      %p97 = por %p95, %p96
      %s99 = sadd.s32 %s98, 1
      %p102 = scmp.eq.s32.totalorder %s17, 1
      %p103 = scmp.ne.s32.totalorder %s98, %s100
      %p104 = scmp.eq.s32.totalorder %s17, 0
      %p105 = por %p103, %p104
      %p106 = scmp.ne.s32.totalorder %s98, %s100
      %p107 = scmp.eq.s32.totalorder %s22, 1
      %p108 = por %p106, %p107
      %p109 = scmp.ne.s32.totalorder %s100, %s101
      %p110 = scmp.eq.s32.totalorder %s22, 0
      %p111 = por %p109, %p110
      %p112 = scmp.ne.s32.totalorder %s100, %s101
      %p113 = scmp.eq.s32.totalorder %s23, 1
      %p114 = por %p112, %p113
      %p116 = scmp.ne.s32.totalorder %s101, %s115
      %p117 = scmp.eq.s32.totalorder %s23, 0
      %p118 = por %p116, %p117
      %s120 = sadd.s32 %s119, 1
      %p123 = scmp.eq.s32.totalorder %s17, 1
      %p124 = scmp.ne.s32.totalorder %s119, %s121
      %p125 = scmp.eq.s32.totalorder %s17, 0
      %p126 = por %p124, %p125
      %p127 = scmp.ne.s32.totalorder %s119, %s121
      %p128 = scmp.eq.s32.totalorder %s22, 1
      %p129 = por %p127, %p128
      %p130 = scmp.ne.s32.totalorder %s121, %s122
      %p131 = scmp.eq.s32.totalorder %s22, 0
      %p132 = por %p130, %p131
      %p133 = scmp.ne.s32.totalorder %s121, %s122
      %p134 = scmp.eq.s32.totalorder %s23, 1
      %p135 = por %p133, %p134
      %p137 = scmp.ne.s32.totalorder %s122, %s136
      %p138 = scmp.eq.s32.totalorder %s23, 0
      %p139 = por %p137, %p138
      %s141 = sadd.s32 %s140, 1
      %p144 = scmp.eq.s32.totalorder %s17, 1
      %p145 = scmp.ne.s32.totalorder %s140, %s142
      %p146 = scmp.eq.s32.totalorder %s17, 0
      %p147 = por %p145, %p146
      %p148 = scmp.ne.s32.totalorder %s140, %s142
      %p149 = scmp.eq.s32.totalorder %s22, 1
      %p150 = por %p148, %p149
      %p151 = scmp.ne.s32.totalorder %s142, %s143
      %p152 = scmp.eq.s32.totalorder %s22, 0
      %p153 = por %p151, %p152
      %p154 = scmp.ne.s32.totalorder %s142, %s143
      %p155 = scmp.eq.s32.totalorder %s23, 1
      %p156 = por %p154, %p155
      %p158 = scmp.ne.s32.totalorder %s143, %s157
      %p159 = scmp.eq.s32.totalorder %s23, 0
      %p160 = por %p158, %p159
      %s162 = sadd.s32 %s161, 1
      %p165 = scmp.eq.s32.totalorder %s17, 1
      %p166 = scmp.ne.s32.totalorder %s161, %s163
      %p167 = scmp.eq.s32.totalorder %s17, 0
      %p168 = por %p166, %p167
      %p169 = scmp.ne.s32.totalorder %s161, %s163
      %p170 = scmp.eq.s32.totalorder %s22, 1
      %p171 = por %p169, %p170
      %p172 = scmp.ne.s32.totalorder %s163, %s164
      %p173 = scmp.eq.s32.totalorder %s22, 0
      %p174 = por %p172, %p173
      %p175 = scmp.ne.s32.totalorder %s163, %s164
      %p176 = scmp.eq.s32.totalorder %s23, 1
      %p177 = por %p175, %p176
      %p179 = scmp.ne.s32.totalorder %s164, %s178
      %p180 = scmp.eq.s32.totalorder %s23, 0
      %p181 = por %p179, %p180
      %s182 = ssub.s32 %s17, %s24
      %p183 = scmp.eq.s32.totalorder %s182, 0
      %s185 = sadd.s32 %s184, 1
      %s186 = scalar_select %p183, %s184, %s185
      %p189 = pneg %p183
      %p190 = scmp.eq.s32.totalorder %s17, 1
      %p191 = por %p189, %p190
      %p192 = scmp.ne.s32.totalorder %s184, %s187
      %p193 = scmp.eq.s32.totalorder %s17, 0
      %p194 = por %p192, %p193
      %p195 = scmp.ne.s32.totalorder %s184, %s187
      %p196 = scmp.eq.s32.totalorder %s22, 1
      %p197 = por %p195, %p196
      %p198 = scmp.ne.s32.totalorder %s187, %s188
      %p199 = scmp.eq.s32.totalorder %s22, 0
      %p200 = por %p198, %p199
      %p201 = scmp.ne.s32.totalorder %s187, %s188
      %p202 = scmp.eq.s32.totalorder %s23, 1
      %p203 = por %p201, %p202
      %p205 = scmp.ne.s32.totalorder %s188, %s204
      %p206 = scmp.eq.s32.totalorder %s23, 0
      %p207 = por %p205, %p206
      %p208 = scmp.le.s32.totalorder 1, %s17
      %p209 = scmp.lt.s32.totalorder %s17, 3
      %p210 = pnand %p208, %p209
      %p211 = pneg %p210
      // Predicated region
      $region9: #{tpu_custom_call.1} parent=5 // pred_check
        _
      $region10: #{tpu_custom_call.1} parent=5 // pred_check_branch
        %213 = sbr.rel (%p210) target = $region12
      $region11: #{tpu_custom_call.1} parent=5 // pred_region
        %s214 = ssub.s32 %s17, 1
        // Predicated region
        $region13: #{tpu_custom_call.1} parent=11 // pred_check
          %p215 = pneg %p90
        $region14: #{tpu_custom_call.1} parent=11 // pred_check_branch
          %217 = sbr.rel (%p215) target = $region16
        $region15: #{tpu_custom_call.1} parent=11 // pred_region
          _
        $region16: #{tpu_custom_call.1} parent=11 // pred_fallthru
          _
        // Predicated region
        $region17: #{tpu_custom_call.1} parent=11 // pred_check
          %p218 = pneg %p111
        $region18: #{tpu_custom_call.1} parent=11 // pred_check_branch
          %220 = sbr.rel (%p218) target = $region20
        $region19: #{tpu_custom_call.1} parent=11 // pred_region
          _
        $region20: #{tpu_custom_call.1} parent=11 // pred_fallthru
          _
        // Predicated region
        $region21: #{tpu_custom_call.1} parent=11 // pred_check
          %p221 = pneg %p132
        $region22: #{tpu_custom_call.1} parent=11 // pred_check_branch
          %223 = sbr.rel (%p221) target = $region24
        $region23: #{tpu_custom_call.1} parent=11 // pred_region
          _
        $region24: #{tpu_custom_call.1} parent=11 // pred_fallthru
          _
        // Predicated region
        $region25: #{tpu_custom_call.1} parent=11 // pred_check
          %p224 = pneg %p153
        $region26: #{tpu_custom_call.1} parent=11 // pred_check_branch
          %226 = sbr.rel (%p224) target = $region28
        $region27: #{tpu_custom_call.1} parent=11 // pred_region
          _
        $region28: #{tpu_custom_call.1} parent=11 // pred_fallthru
          _
        // Predicated region
        $region29: #{tpu_custom_call.1} parent=11 // pred_check
          %p227 = pneg %p174
        $region30: #{tpu_custom_call.1} parent=11 // pred_check_branch
          %229 = sbr.rel (%p227) target = $region32
        $region31: #{tpu_custom_call.1} parent=11 // pred_region
          _
        $region32: #{tpu_custom_call.1} parent=11 // pred_fallthru
          _
      $region12: #{tpu_custom_call.1} parent=5 // pred_fallthru
        _
      %p230 = scmp.lt.s32.totalorder %s17, 2
      // Predicated region
      $region33: #{tpu_custom_call.1} parent=5 // pred_check
        %p231 = pneg %p230
      $region34: #{tpu_custom_call.1} parent=5 // pred_check_branch
        %233 = sbr.rel (%p231) target = $region36
      $region35: #{tpu_custom_call.1} parent=5 // pred_region
        // Predicated region
        $region37: #{tpu_custom_call.1} parent=35 // pred_check
          %p234 = pneg %p37
        $region38: #{tpu_custom_call.1} parent=35 // pred_check_branch
          %236 = sbr.rel (%p234) target = $region40
        $region39: #{tpu_custom_call.1} parent=35 // pred_region
          %s237 = smul.u32 13, %s17
          %s238 = ssub.s32 25, %s237
          %p239 = scmp.lt.s32.totalorder %s238, 13
          %s240 = scalar_select %p239, %s238, 13
          %s241 = smul.u32 128, %s240
          %p242 = scmp.lt.s32.totalorder %s237, 24
          %s243 = scalar_select %p242, %s237, 24
          %s244 = smul.addr %s243, 8
          %s245 = scalar_lea.vmem %s0, %s244
          %s246 = smul.u32 13, %s17
          %s247 = ssub.s32 25, %s246
          %p248 = scmp.lt.s32.totalorder %s247, 13
          %s249 = scalar_select %p248, %s247, 13
          %s250 = smul.u32 128, %s249
        $region40: #{tpu_custom_call.1} parent=35 // pred_fallthru
          _
        // Predicated region
        $region41: #{tpu_custom_call.1} parent=35 // pred_check
          %p251 = pneg %p63
        $region42: #{tpu_custom_call.1} parent=35 // pred_check_branch
          %253 = sbr.rel (%p251) target = $region44
        $region43: #{tpu_custom_call.1} parent=35 // pred_region
          %s254 = smul.u32 13, %s17
          %s255 = ssub.s32 25, %s254
          %p256 = scmp.lt.s32.totalorder %s255, 13
          %s257 = scalar_select %p256, %s255, 13
          %s258 = smul.u32 128, %s257
          %p259 = scmp.lt.s32.totalorder %s254, 24
          %s260 = scalar_select %p259, %s254, 24
          %s261 = smul.addr %s260, 8
          %s262 = scalar_lea.vmem %s1, %s261
          %s263 = smul.u32 13, %s17
          %s264 = ssub.s32 25, %s263
          %p265 = scmp.lt.s32.totalorder %s264, 13
          %s266 = scalar_select %p265, %s264, 13
          %s267 = smul.u32 128, %s266
        $region44: #{tpu_custom_call.1} parent=35 // pred_fallthru
          _
      $region36: #{tpu_custom_call.1} parent=5 // pred_fallthru
        _
      %p268 = scmp.le.s32.totalorder 1, %s17
      %p269 = scmp.lt.s32.totalorder %s17, 3
      %p270 = pnand %p268, %p269
      %p271 = pneg %p270
      // Predicated region
      $region45: #{tpu_custom_call.1} parent=5 // pred_check
        _
      $region46: #{tpu_custom_call.1} parent=5 // pred_check_branch
        %273 = sbr.rel (%p270) target = $region48
      $region47: #{tpu_custom_call.1} parent=5 // pred_region
        %s274 = ssub.s32 %s17, 1
        %s275 = smul.u32 13, %s22
        %s276 = ssub.s32 25, %s275
        %p277 = scmp.lt.s32.totalorder %s276, 13
        %s278 = scalar_select %p277, %s276, 13
        %s279 = smul.u32 128, %s278
        %p280 = scmp.lt.s32.totalorder %s275, 24
        %s281 = scalar_select %p280, %s275, 24
        %s282 = smul.addr %s281, 8
        %s283 = scalar_lea.vmem %s0, %s282
        %p284 = pneg %p43
        %p285 = pneg %p40
        %s286 = smul.u32 13, %s22
        %s287 = ssub.s32 25, %s286
        %p288 = scmp.lt.s32.totalorder %s287, 13
        %s289 = scalar_select %p288, %s287, 13
        %s290 = smul.u32 128, %s289
        %p291 = scmp.lt.s32.totalorder %s286, 24
        %s292 = scalar_select %p291, %s286, 24
        %s293 = smul.addr %s292, 8
        %s294 = scalar_lea.vmem %s1, %s293
        %p295 = pneg %p69
        %p296 = pneg %p66
        %p297 = pneg %p90
        %p298 = pneg %p87
        %p299 = pneg %p111
        %p300 = pneg %p108
        %p301 = pneg %p132
        %p302 = pneg %p129
        %p303 = pneg %p153
        %p304 = pneg %p150
        %p305 = pneg %p174
        %p306 = pneg %p171
        %p307 = pneg %p200
        %p308 = pneg %p197
        %s309 = sand.u32 %s187, 1
        %s310 = scalar_lea.sflag [#allocation4], %s309
        %s311 = sand.u32 %s187, 1
        %s312 = scalar_lea.vmem [#allocation3], %s311
        %s313 = smul.u32 13, %s22
        %s314 = ssub.s32 25, %s313
        %p315 = scmp.lt.s32.totalorder %s314, 13
        %s316 = scalar_select %p315, %s314, 13
        %s317 = smul.u32 128, %s316
        %p318 = scmp.lt.s32.totalorder %s313, 24
        %s319 = scalar_select %p318, %s313, 24
        %s320 = smul.addr %s319, 8
        %s321 = scalar_lea.vmem %s0, %s320
        %s322 = smul.u32 13, %s22
        %s323 = ssub.s32 25, %s322
        %p324 = scmp.lt.s32.totalorder %s323, 13
        %s325 = scalar_select %p324, %s323, 13
        %s326 = smul.u32 128, %s325
        %s327 = smul.u32 13, %s22
        %s328 = ssub.s32 25, %s327
        %p329 = scmp.lt.s32.totalorder %s328, 13
        %s330 = scalar_select %p329, %s328, 13
        %s331 = smul.u32 128, %s330
        %p332 = scmp.lt.s32.totalorder %s327, 24
        %s333 = scalar_select %p332, %s327, 24
        %s334 = smul.addr %s333, 8
        %s335 = scalar_lea.vmem %s1, %s334
        %s336 = smul.u32 13, %s22
        %s337 = ssub.s32 25, %s336
        %p338 = scmp.lt.s32.totalorder %s337, 13
        %s339 = scalar_select %p338, %s337, 13
        %s340 = smul.u32 128, %s339
        %s341 = sld [smem:[#allocation2]]
        %v342 = vld [vmem:[%s321] sm:$0xff]
        %v343 = vld [vmem:[%s321 + $0x8] sm:$0xff]
        %v344 = vld [vmem:[%s321 + $0x10] sm:$0xff]
        %v345 = vld [vmem:[%s321 + $0x18] sm:$0xff]
        %v346 = vld [vmem:[%s321 + $0x20] sm:$0xff]
        %v347 = vld [vmem:[%s321 + $0x28] sm:$0xff]
        %v348 = vld [vmem:[%s321 + $0x30] sm:$0xff]
        %v349 = vld [vmem:[%s321 + $0x38] sm:$0xff]
        %v350 = vld [vmem:[%s321 + $0x40] sm:$0xff]
        %v351 = vld [vmem:[%s321 + $0x48] sm:$0xff]
        %v352 = vld [vmem:[%s321 + $0x50] sm:$0xff]
        %v353 = vld [vmem:[%s321 + $0x58] sm:$0xff]
        %v354 = vld [vmem:[%s321 + $0x60] sm:$0xff]
        %v355 = vld [vmem:[%s335] sm:$0xff]
        %v356 = vld [vmem:[%s335 + $0x8] sm:$0xff]
        %v357 = vld [vmem:[%s335 + $0x10] sm:$0xff]
        %v358 = vld [vmem:[%s335 + $0x18] sm:$0xff]
        %v359 = vld [vmem:[%s335 + $0x20] sm:$0xff]
        %v360 = vld [vmem:[%s335 + $0x28] sm:$0xff]
        %v361 = vld [vmem:[%s335 + $0x30] sm:$0xff]
        %v362 = vld [vmem:[%s335 + $0x38] sm:$0xff]
        %v363 = vld [vmem:[%s335 + $0x40] sm:$0xff]
        %v364 = vld [vmem:[%s335 + $0x48] sm:$0xff]
        %v365 = vld [vmem:[%s335 + $0x50] sm:$0xff]
        %v366 = vld [vmem:[%s335 + $0x58] sm:$0xff]
        %v367 = vld [vmem:[%s335 + $0x60] sm:$0xff]
        %v368 = vld [vmem:[%s2] sm:$0xff]
        %v369 = vld [vmem:[%s2 + $0x8] sm:$0xff]
        %v370 = vld [vmem:[%s2 + $0x10] sm:$0xff]
        %v371 = vld [vmem:[%s2 + $0x18] sm:$0xff]
        %v372 = vld [vmem:[%s2 + $0x20] sm:$0xff]
        %v373 = vld [vmem:[%s2 + $0x28] sm:$0xff]
        %v374 = vld [vmem:[%s2 + $0x30] sm:$0xff]
        %v375 = vld [vmem:[%s2 + $0x38] sm:$0xff]
        %v376 = vld [vmem:[%s2 + $0x40] sm:$0xff]
        %v377 = vld [vmem:[%s2 + $0x48] sm:$0xff]
        %v378 = vld [vmem:[%s2 + $0x50] sm:$0xff]
        %v379 = vld [vmem:[%s2 + $0x58] sm:$0xff]
        %v380 = vld [vmem:[%s3] ss:$2 sm:$0x7]
        %382 = vset.pattern.permute.xlu0 0
        %383 = vperm.xlu0 %382, %v355
        %v384 = vpop.permute.xlu0 %383
        %387 = vset.pattern.permute.xlu0 0
        %388 = vperm.xlu0 %387, %v356
        %v389 = vpop.permute.xlu0 %388
        %392 = vset.pattern.permute.xlu0 0
        %393 = vperm.xlu0 %392, %v357
        %v394 = vpop.permute.xlu0 %393
        %397 = vset.pattern.permute.xlu0 0
        %398 = vperm.xlu0 %397, %v358
        %v399 = vpop.permute.xlu0 %398
        %402 = vset.pattern.permute.xlu0 0
        %403 = vperm.xlu0 %402, %v359
        %v404 = vpop.permute.xlu0 %403
        %407 = vset.pattern.permute.xlu0 0
        %408 = vperm.xlu0 %407, %v360
        %v409 = vpop.permute.xlu0 %408
        %412 = vset.pattern.permute.xlu0 0
        %413 = vperm.xlu0 %412, %v361
        %v414 = vpop.permute.xlu0 %413
        %417 = vset.pattern.permute.xlu0 0
        %418 = vperm.xlu0 %417, %v362
        %v419 = vpop.permute.xlu0 %418
        %422 = vset.pattern.permute.xlu0 0
        %423 = vperm.xlu0 %422, %v363
        %v424 = vpop.permute.xlu0 %423
        %427 = vset.pattern.permute.xlu0 0
        %428 = vperm.xlu0 %427, %v364
        %v429 = vpop.permute.xlu0 %428
        %432 = vset.pattern.permute.xlu0 0
        %433 = vperm.xlu0 %432, %v365
        %v434 = vpop.permute.xlu0 %433
        %437 = vset.pattern.permute.xlu0 0
        %438 = vperm.xlu0 %437, %v366
        %v439 = vpop.permute.xlu0 %438
        %442 = vset.pattern.permute.xlu0 0
        %443 = vperm.xlu0 %442, %v367
        %v444 = vpop.permute.xlu0 %443
        %v447 = vlaneseq
        %v448 = vshrl.u32 %v447, 7
        %v449 = vsub.s32 0, %v448
        %v450 = vrot.slane %v380, %v449
        %v451 = vlaneseq
        %v452 = vshrl.u32 %v451, 7
        %v453 = vsub.s32 1, %v452
        %v454 = vrot.slane %v380, %v453
        %v455 = vlaneseq
        %v456 = vshrl.u32 %v455, 7
        %v457 = vsub.s32 2, %v456
        %v458 = vrot.slane %v380, %v457
        %v462 = vmul.f32 %v384, %v450
        %v463 = vmul.f32 %v384, %v454
        %v464 = vmul.f32 %v384, %v458
        %v465 = vmul.f32 %v389, %v450
        %v466 = vmul.f32 %v389, %v454
        %v467 = vmul.f32 %v389, %v458
        %v468 = vmul.f32 %v394, %v450
        %v469 = vmul.f32 %v394, %v454
        %v470 = vmul.f32 %v394, %v458
        %v471 = vmul.f32 %v399, %v450
        %v472 = vmul.f32 %v399, %v454
        %v473 = vmul.f32 %v399, %v458
        %v474 = vmul.f32 %v404, %v450
        %v475 = vmul.f32 %v404, %v454
        %v476 = vmul.f32 %v404, %v458
        %v477 = vmul.f32 %v409, %v450
        %v478 = vmul.f32 %v409, %v454
        %v479 = vmul.f32 %v409, %v458
        %v480 = vmul.f32 %v414, %v450
        %v481 = vmul.f32 %v414, %v454
        %v482 = vmul.f32 %v414, %v458
        %v483 = vmul.f32 %v419, %v450
        %v484 = vmul.f32 %v419, %v454
        %v485 = vmul.f32 %v419, %v458
        %v486 = vmul.f32 %v424, %v450
        %v487 = vmul.f32 %v424, %v454
        %v488 = vmul.f32 %v424, %v458
        %v489 = vmul.f32 %v429, %v450
        %v490 = vmul.f32 %v429, %v454
        %v491 = vmul.f32 %v429, %v458
        %v492 = vmul.f32 %v434, %v450
        %v493 = vmul.f32 %v434, %v454
        %v494 = vmul.f32 %v434, %v458
        %v495 = vmul.f32 %v439, %v450
        %v496 = vmul.f32 %v439, %v454
        %v497 = vmul.f32 %v439, %v458
        %v498 = vmul.f32 %v444, %v450
        %v499 = vmul.f32 %v444, %v454
        %v500 = vmul.f32 %v444, %v458
        %vm501 = vcmask 261120
        %v503 = vsel %vm501, %v342, 0
        %v506 = vsel %vm501, %v343, 0
        %v509 = vsel %vm501, %v344, 0
        %v512 = vsel %vm501, %v345, 0
        %v515 = vsel %vm501, %v346, 0
        %v518 = vsel %vm501, %v347, 0
        %v521 = vsel %vm501, %v348, 0
        %v524 = vsel %vm501, %v349, 0
        %v527 = vsel %vm501, %v350, 0
        %v530 = vsel %vm501, %v351, 0
        %v533 = vsel %vm501, %v352, 0
        %v536 = vsel %vm501, %v353, 0
        %v539 = vsel %vm501, %v354, 0
        %541 = vmatprep.subr.mxu0 0.0
        %542 = vmatpush1.msra.mxu0 0.0
        %543 = vmatprep.subr.mxu0 0.0
        %544 = vmatpush1.msra.mxu0 0.0
        %545 = vmatprep.subr.mxu0 0.0
        %546 = vmatpush1.msra.mxu0 0.0
        %547 = vmatprep.subr.mxu0 0.0
        %548 = vmatpush1.msra.mxu0 0.0
        %549 = vmatprep.subr.mxu0 0.0
        %550 = vmatpush1.msra.mxu0 0.0
        %551 = vmatprep.subr.mxu0 0.0
        %552 = vmatpush1.msra.mxu0 0.0
        %553 = vmatprep.subr.mxu0 0.0
        %554 = vmatpush1.msra.mxu0 0.0
        %555 = vmatprep.subr.mxu0 0.0
        %556 = vmatpush1.msra.mxu0 0.0
        %557 = vmatprep.subr.mxu0 0.0
        %558 = vmatpush1.msra.mxu0 0.0
        %559 = vmatprep.subr.mxu0 0.0
        %560 = vmatpush1.msra.mxu0 0.0
        %561 = vmatprep.subr.mxu0 0.0
        %562 = vmatpush1.msra.mxu0 0.0
        %563 = vmatprep.subr.mxu0 0.0
        %564 = vmatpush1.msra.mxu0 0.0
        %565 = vmatprep.subr.mxu0 %v378
        %566 = vmatpush1.msra.mxu0 %v377
        %567 = vmatprep.subr.mxu0 %v375
        %568 = vmatpush1.msra.mxu0 %v374
        %569 = vmatprep.subr.mxu0 %v372
        %570 = vmatpush1.msra.mxu0 %v371
        %571 = vmatprep.subr.mxu0 %v369
        %572 = vmatpush1.msra.mxu0 %v368
        %573 = vmatprep.subr.mxu0 0.0
        %574 = vmatpush2.msra.mxu0 0.0
        %575 = vmatprep.subr.mxu0 0.0
        %576 = vmatpush2.msra.mxu0 0.0
        %577 = vmatprep.subr.mxu0 0.0
        %578 = vmatpush2.msra.mxu0 0.0
        %579 = vmatprep.subr.mxu0 0.0
        %580 = vmatpush2.msra.mxu0 0.0
        %581 = vmatprep.subr.mxu0 0.0
        %582 = vmatpush2.msra.mxu0 0.0
        %583 = vmatprep.subr.mxu0 0.0
        %584 = vmatpush2.msra.mxu0 0.0
        %585 = vmatprep.subr.mxu0 0.0
        %586 = vmatpush2.msra.mxu0 0.0
        %587 = vmatprep.subr.mxu0 0.0
        %588 = vmatpush2.msra.mxu0 0.0
        %589 = vmatprep.subr.mxu0 0.0
        %590 = vmatpush2.msra.mxu0 0.0
        %591 = vmatprep.subr.mxu0 0.0
        %592 = vmatpush2.msra.mxu0 0.0
        %593 = vmatprep.subr.mxu0 0.0
        %594 = vmatpush2.msra.mxu0 0.0
        %595 = vmatprep.subr.mxu0 0.0
        %596 = vmatpush2.msra.mxu0 0.0
        %597 = vmatprep.subr.mxu0 0.0
        %598 = vmatpush2.msra.mxu0 0.0
        %599 = vmatprep.subr.mxu0 0.0
        %600 = vmatpush2.msra.mxu0 0.0
        %601 = vmatprep.subr.mxu0 0.0
        %602 = vmatpush2.msra.mxu0 0.0
        %603 = vmatprep.subr.mxu0 0.0
        %604 = vmatpush2.msra.mxu0 0.0
        %605 = vmatprep.mubr.f32.mxu0 0.0
        %606 = vmatmul.mubr.f32.gmra.mxu0 %v503
        %v607 = vpop.f32.mrf.mxu0
        %v608 = vadd.f32 %v462, %v607
        %v609 = vpop.f32.mrf.mxu0
        %v610 = vadd.f32 %v463, %v609
        %611 = vmatprep.mubr.f32.mxu0 0.0
        %612 = vmatmul.mubr.f32.gmra.mxu0 %v506
        %v613 = vpop.f32.mrf.mxu0
        %v614 = vadd.f32 %v465, %v613
        %v615 = vpop.f32.mrf.mxu0
        %v616 = vadd.f32 %v466, %v615
        %617 = vmatprep.mubr.f32.mxu0 0.0
        %618 = vmatmul.mubr.f32.gmra.mxu0 %v509
        %v619 = vpop.f32.mrf.mxu0
        %v620 = vadd.f32 %v468, %v619
        %v621 = vpop.f32.mrf.mxu0
        %v622 = vadd.f32 %v469, %v621
        %623 = vmatprep.mubr.f32.mxu0 0.0
        %624 = vmatmul.mubr.f32.gmra.mxu0 %v512
        %v625 = vpop.f32.mrf.mxu0
        %v626 = vadd.f32 %v471, %v625
        %v627 = vpop.f32.mrf.mxu0
        %v628 = vadd.f32 %v472, %v627
        %629 = vmatprep.mubr.f32.mxu0 0.0
        %630 = vmatmul.mubr.f32.gmra.mxu0 %v515
        %v631 = vpop.f32.mrf.mxu0
        %v632 = vadd.f32 %v474, %v631
        %v633 = vpop.f32.mrf.mxu0
        %v634 = vadd.f32 %v475, %v633
        %635 = vmatprep.mubr.f32.mxu0 0.0
        %636 = vmatmul.mubr.f32.gmra.mxu0 %v518
        %v637 = vpop.f32.mrf.mxu0
        %v638 = vadd.f32 %v477, %v637
        %v639 = vpop.f32.mrf.mxu0
        %v640 = vadd.f32 %v478, %v639
        %641 = vmatprep.mubr.f32.mxu0 0.0
        %642 = vmatmul.mubr.f32.gmra.mxu0 %v521
        %v643 = vpop.f32.mrf.mxu0
        %v644 = vadd.f32 %v480, %v643
        %v645 = vpop.f32.mrf.mxu0
        %v646 = vadd.f32 %v481, %v645
        %647 = vmatprep.mubr.f32.mxu0 0.0
        %648 = vmatmul.mubr.f32.gmra.mxu0 %v524
        %v649 = vpop.f32.mrf.mxu0
        %v650 = vadd.f32 %v483, %v649
        %v651 = vpop.f32.mrf.mxu0
        %v652 = vadd.f32 %v484, %v651
        %653 = vmatprep.mubr.f32.mxu0 0.0
        %654 = vmatmul.mubr.f32.gmra.mxu0 %v527
        %v655 = vpop.f32.mrf.mxu0
        %v656 = vadd.f32 %v486, %v655
        %v657 = vpop.f32.mrf.mxu0
        %v658 = vadd.f32 %v487, %v657
        %659 = vmatprep.mubr.f32.mxu0 0.0
        %660 = vmatmul.mubr.f32.gmra.mxu0 %v530
        %v661 = vpop.f32.mrf.mxu0
        %v662 = vadd.f32 %v489, %v661
        %v663 = vpop.f32.mrf.mxu0
        %v664 = vadd.f32 %v490, %v663
        %665 = vmatprep.mubr.f32.mxu0 0.0
        %666 = vmatmul.mubr.f32.gmra.mxu0 %v533
        %v667 = vpop.f32.mrf.mxu0
        %v668 = vadd.f32 %v492, %v667
        %v669 = vpop.f32.mrf.mxu0
        %v670 = vadd.f32 %v493, %v669
        %671 = vmatprep.mubr.f32.mxu0 0.0
        %672 = vmatmul.mubr.f32.gmra.mxu0 %v536
        %v673 = vpop.f32.mrf.mxu0
        %v674 = vadd.f32 %v495, %v673
        %v675 = vpop.f32.mrf.mxu0
        %v676 = vadd.f32 %v496, %v675
        %677 = vmatprep.mubr.f32.mxu0 0.0
        %678 = vmatmul.mubr.f32.gmra.mxu0 %v539
        %v679 = vpop.f32.mrf.mxu0
        %v680 = vadd.f32 %v498, %v679
        %v681 = vpop.f32.mrf.mxu0
        %v682 = vadd.f32 %v499, %v681
        %683 = vdwg.mxu0
        %684 = vmatprep.subr.mxu0 0.0
        %685 = vmatpush1.msra.mxu0 0.0
        %686 = vmatprep.subr.mxu0 0.0
        %687 = vmatpush1.msra.mxu0 0.0
        %688 = vmatprep.subr.mxu0 0.0
        %689 = vmatpush1.msra.mxu0 0.0
        %690 = vmatprep.subr.mxu0 0.0
        %691 = vmatpush1.msra.mxu0 0.0
        %692 = vmatprep.subr.mxu0 0.0
        %693 = vmatpush1.msra.mxu0 0.0
        %694 = vmatprep.subr.mxu0 0.0
        %695 = vmatpush1.msra.mxu0 0.0
        %696 = vmatprep.subr.mxu0 0.0
        %697 = vmatpush1.msra.mxu0 0.0
        %698 = vmatprep.subr.mxu0 0.0
        %699 = vmatpush1.msra.mxu0 0.0
        %700 = vmatprep.subr.mxu0 0.0
        %701 = vmatpush1.msra.mxu0 0.0
        %702 = vmatprep.subr.mxu0 0.0
        %703 = vmatpush1.msra.mxu0 0.0
        %704 = vmatprep.subr.mxu0 0.0
        %705 = vmatpush1.msra.mxu0 0.0
        %706 = vmatprep.subr.mxu0 0.0
        %707 = vmatpush1.msra.mxu0 0.0
        %708 = vmatprep.subr.mxu0 0.0
        %709 = vmatpush1.msra.mxu0 %v379
        %710 = vmatprep.subr.mxu0 0.0
        %711 = vmatpush1.msra.mxu0 %v376
        %712 = vmatprep.subr.mxu0 0.0
        %713 = vmatpush1.msra.mxu0 %v373
        %714 = vmatprep.subr.mxu0 0.0
        %715 = vmatpush1.msra.mxu0 %v370
        %716 = vmatprep.subr.mxu0 0.0
        %717 = vmatpush2.msra.mxu0 0.0
        %718 = vmatprep.subr.mxu0 0.0
        %719 = vmatpush2.msra.mxu0 0.0
        %720 = vmatprep.subr.mxu0 0.0
        %721 = vmatpush2.msra.mxu0 0.0
        %722 = vmatprep.subr.mxu0 0.0
        %723 = vmatpush2.msra.mxu0 0.0
        %724 = vmatprep.subr.mxu0 0.0
        %725 = vmatpush2.msra.mxu0 0.0
        %726 = vmatprep.subr.mxu0 0.0
        %727 = vmatpush2.msra.mxu0 0.0
        %728 = vmatprep.subr.mxu0 0.0
        %729 = vmatpush2.msra.mxu0 0.0
        %730 = vmatprep.subr.mxu0 0.0
        %731 = vmatpush2.msra.mxu0 0.0
        %732 = vmatprep.subr.mxu0 0.0
        %733 = vmatpush2.msra.mxu0 0.0
        %734 = vmatprep.subr.mxu0 0.0
        %735 = vmatpush2.msra.mxu0 0.0
        %736 = vmatprep.subr.mxu0 0.0
        %737 = vmatpush2.msra.mxu0 0.0
        %738 = vmatprep.subr.mxu0 0.0
        %739 = vmatpush2.msra.mxu0 0.0
        %740 = vmatprep.subr.mxu0 0.0
        %741 = vmatpush2.msra.mxu0 0.0
        %742 = vmatprep.subr.mxu0 0.0
        %743 = vmatpush2.msra.mxu0 0.0
        %744 = vmatprep.subr.mxu0 0.0
        %745 = vmatpush2.msra.mxu0 0.0
        %746 = vmatprep.subr.mxu0 0.0
        %747 = vmatpush2.msra.mxu0 0.0
        %748 = vmatprep.mubr.f32.mxu0 0.0
        %749 = vmatmul.mubr.f32.gmra.mxu0 %v503
        %v750 = vpop.f32.mrf.mxu0
        %v751 = vadd.f32 %v464, %v750
        %v752 = vpop.f32.mrf.mxu0
        %753 = vmatprep.mubr.f32.mxu0 0.0
        %754 = vmatmul.mubr.f32.gmra.mxu0 %v506
        %v755 = vpop.f32.mrf.mxu0
        %v756 = vadd.f32 %v467, %v755
        %v757 = vpop.f32.mrf.mxu0
        %758 = vmatprep.mubr.f32.mxu0 0.0
        %759 = vmatmul.mubr.f32.gmra.mxu0 %v509
        %v760 = vpop.f32.mrf.mxu0
        %v761 = vadd.f32 %v470, %v760
        %v762 = vpop.f32.mrf.mxu0
        %763 = vmatprep.mubr.f32.mxu0 0.0
        %764 = vmatmul.mubr.f32.gmra.mxu0 %v512
        %v765 = vpop.f32.mrf.mxu0
        %v766 = vadd.f32 %v473, %v765
        %v767 = vpop.f32.mrf.mxu0
        %768 = vmatprep.mubr.f32.mxu0 0.0
        %769 = vmatmul.mubr.f32.gmra.mxu0 %v515
        %v770 = vpop.f32.mrf.mxu0
        %v771 = vadd.f32 %v476, %v770
        %v772 = vpop.f32.mrf.mxu0
        %773 = vmatprep.mubr.f32.mxu0 0.0
        %774 = vmatmul.mubr.f32.gmra.mxu0 %v518
        %v775 = vpop.f32.mrf.mxu0
        %v776 = vadd.f32 %v479, %v775
        %v777 = vpop.f32.mrf.mxu0
        %778 = vmatprep.mubr.f32.mxu0 0.0
        %779 = vmatmul.mubr.f32.gmra.mxu0 %v521
        %v780 = vpop.f32.mrf.mxu0
        %v781 = vadd.f32 %v482, %v780
        %v782 = vpop.f32.mrf.mxu0
        %783 = vmatprep.mubr.f32.mxu0 0.0
        %784 = vmatmul.mubr.f32.gmra.mxu0 %v524
        %v785 = vpop.f32.mrf.mxu0
        %v786 = vadd.f32 %v485, %v785
        %v787 = vpop.f32.mrf.mxu0
        %788 = vmatprep.mubr.f32.mxu0 0.0
        %789 = vmatmul.mubr.f32.gmra.mxu0 %v527
        %v790 = vpop.f32.mrf.mxu0
        %v791 = vadd.f32 %v488, %v790
        %v792 = vpop.f32.mrf.mxu0
        %793 = vmatprep.mubr.f32.mxu0 0.0
        %794 = vmatmul.mubr.f32.gmra.mxu0 %v530
        %v795 = vpop.f32.mrf.mxu0
        %v796 = vadd.f32 %v491, %v795
        %v797 = vpop.f32.mrf.mxu0
        %798 = vmatprep.mubr.f32.mxu0 0.0
        %799 = vmatmul.mubr.f32.gmra.mxu0 %v533
        %v800 = vpop.f32.mrf.mxu0
        %v801 = vadd.f32 %v494, %v800
        %v802 = vpop.f32.mrf.mxu0
        %803 = vmatprep.mubr.f32.mxu0 0.0
        %804 = vmatmul.mubr.f32.gmra.mxu0 %v536
        %v805 = vpop.f32.mrf.mxu0
        %v806 = vadd.f32 %v497, %v805
        %v807 = vpop.f32.mrf.mxu0
        %808 = vmatprep.mubr.f32.mxu0 0.0
        %809 = vmatmul.mubr.f32.gmra.mxu0 %v539
        %v810 = vpop.f32.mrf.mxu0
        %v811 = vadd.f32 %v500, %v810
        %v812 = vpop.f32.mrf.mxu0
        %813 = vdwg.mxu0
        %s814 = scalar_lea.vmem %s3, 1
        %v815 = vld [vmem:[%s814] ss:$2 sm:$0x7]
        %816 = vset.pattern.permute.xlu0 1
        %817 = vperm.xlu0 %816, %v355
        %v818 = vpop.permute.xlu0 %817
        %820 = vset.pattern.permute.xlu0 1
        %821 = vperm.xlu0 %820, %v356
        %v822 = vpop.permute.xlu0 %821
        %824 = vset.pattern.permute.xlu0 1
        %825 = vperm.xlu0 %824, %v357
        %v826 = vpop.permute.xlu0 %825
        %828 = vset.pattern.permute.xlu0 1
        %829 = vperm.xlu0 %828, %v358
        %v830 = vpop.permute.xlu0 %829
        %832 = vset.pattern.permute.xlu0 1
        %833 = vperm.xlu0 %832, %v359
        %v834 = vpop.permute.xlu0 %833
        %836 = vset.pattern.permute.xlu0 1
        %837 = vperm.xlu0 %836, %v360
        %v838 = vpop.permute.xlu0 %837
        %840 = vset.pattern.permute.xlu0 1
        %841 = vperm.xlu0 %840, %v361
        %v842 = vpop.permute.xlu0 %841
        %844 = vset.pattern.permute.xlu0 1
        %845 = vperm.xlu0 %844, %v362
        %v846 = vpop.permute.xlu0 %845
        %848 = vset.pattern.permute.xlu0 1
        %849 = vperm.xlu0 %848, %v363
        %v850 = vpop.permute.xlu0 %849
        %852 = vset.pattern.permute.xlu0 1
        %853 = vperm.xlu0 %852, %v364
        %v854 = vpop.permute.xlu0 %853
        %856 = vset.pattern.permute.xlu0 1
        %857 = vperm.xlu0 %856, %v365
        %v858 = vpop.permute.xlu0 %857
        %860 = vset.pattern.permute.xlu0 1
        %861 = vperm.xlu0 %860, %v366
        %v862 = vpop.permute.xlu0 %861
        %864 = vset.pattern.permute.xlu0 1
        %865 = vperm.xlu0 %864, %v367
        %v866 = vpop.permute.xlu0 %865
        %v869 = vlaneseq
        %v870 = vshrl.u32 %v869, 7
        %v871 = vsub.s32 0, %v870
        %v872 = vrot.slane %v815, %v871
        %v873 = vlaneseq
        %v874 = vshrl.u32 %v873, 7
        %v875 = vsub.s32 1, %v874
        %v876 = vrot.slane %v815, %v875
        %v877 = vlaneseq
        %v878 = vshrl.u32 %v877, 7
        %v879 = vsub.s32 2, %v878
        %v880 = vrot.slane %v815, %v879
        %v884 = vmul.f32 %v818, %v872
        %v885 = vmul.f32 %v818, %v876
        %v886 = vmul.f32 %v818, %v880
        %v887 = vmul.f32 %v822, %v872
        %v888 = vmul.f32 %v822, %v876
        %v889 = vmul.f32 %v822, %v880
        %v890 = vmul.f32 %v826, %v872
        %v891 = vmul.f32 %v826, %v876
        %v892 = vmul.f32 %v826, %v880
        %v893 = vmul.f32 %v830, %v872
        %v894 = vmul.f32 %v830, %v876
        %v895 = vmul.f32 %v830, %v880
        %v896 = vmul.f32 %v834, %v872
        %v897 = vmul.f32 %v834, %v876
        %v898 = vmul.f32 %v834, %v880
        %v899 = vmul.f32 %v838, %v872
        %v900 = vmul.f32 %v838, %v876
        %v901 = vmul.f32 %v838, %v880
        %v902 = vmul.f32 %v842, %v872
        %v903 = vmul.f32 %v842, %v876
        %v904 = vmul.f32 %v842, %v880
        %v905 = vmul.f32 %v846, %v872
        %v906 = vmul.f32 %v846, %v876
        %v907 = vmul.f32 %v846, %v880
        %v908 = vmul.f32 %v850, %v872
        %v909 = vmul.f32 %v850, %v876
        %v910 = vmul.f32 %v850, %v880
        %v911 = vmul.f32 %v854, %v872
        %v912 = vmul.f32 %v854, %v876
        %v913 = vmul.f32 %v854, %v880
        %v914 = vmul.f32 %v858, %v872
        %v915 = vmul.f32 %v858, %v876
        %v916 = vmul.f32 %v858, %v880
        %v917 = vmul.f32 %v862, %v872
        %v918 = vmul.f32 %v862, %v876
        %v919 = vmul.f32 %v862, %v880
        %v920 = vmul.f32 %v866, %v872
        %v921 = vmul.f32 %v866, %v876
        %v922 = vmul.f32 %v866, %v880
        %v923 = vadd.f32 %v608, %v884
        %v924 = vadd.f32 %v610, %v885
        %v925 = vadd.f32 %v751, %v886
        %v926 = vadd.f32 %v614, %v887
        %v927 = vadd.f32 %v616, %v888
        %v928 = vadd.f32 %v756, %v889
        %v929 = vadd.f32 %v620, %v890
        %v930 = vadd.f32 %v622, %v891
        %v931 = vadd.f32 %v761, %v892
        %v932 = vadd.f32 %v626, %v893
        %v933 = vadd.f32 %v628, %v894
        %v934 = vadd.f32 %v766, %v895
        %v935 = vadd.f32 %v632, %v896
        %v936 = vadd.f32 %v634, %v897
        %v937 = vadd.f32 %v771, %v898
        %v938 = vadd.f32 %v638, %v899
        %v939 = vadd.f32 %v640, %v900
        %v940 = vadd.f32 %v776, %v901
        %v941 = vadd.f32 %v644, %v902
        %v942 = vadd.f32 %v646, %v903
        %v943 = vadd.f32 %v781, %v904
        %v944 = vadd.f32 %v650, %v905
        %v945 = vadd.f32 %v652, %v906
        %v946 = vadd.f32 %v786, %v907
        %v947 = vadd.f32 %v656, %v908
        %v948 = vadd.f32 %v658, %v909
        %v949 = vadd.f32 %v791, %v910
        %v950 = vadd.f32 %v662, %v911
        %v951 = vadd.f32 %v664, %v912
        %v952 = vadd.f32 %v796, %v913
        %v953 = vadd.f32 %v668, %v914
        %v954 = vadd.f32 %v670, %v915
        %v955 = vadd.f32 %v801, %v916
        %v956 = vadd.f32 %v674, %v917
        %v957 = vadd.f32 %v676, %v918
        %v958 = vadd.f32 %v806, %v919
        %v959 = vadd.f32 %v680, %v920
        %v960 = vadd.f32 %v682, %v921
        %v961 = vadd.f32 %v811, %v922
        %v962 = vld [vmem:[%s4] sm:$0x7]
        %v964 = vlaneseq
        %v965 = vshrl.u32 %v964, 7
        %v966 = vsub.s32 0, %v965
        %v967 = vrot.slane %v962, %v966
        %v968 = vlaneseq
        %v969 = vshrl.u32 %v968, 7
        %v970 = vsub.s32 1, %v969
        %v971 = vrot.slane %v962, %v970
        %v972 = vlaneseq
        %v973 = vshrl.u32 %v972, 7
        %v974 = vsub.s32 2, %v973
        %v975 = vrot.slane %v962, %v974
        %v979 = vadd.f32 %v923, %v967
        %v980 = vadd.f32 %v924, %v971
        %v981 = vadd.f32 %v925, %v975
        %v982 = vadd.f32 %v926, %v967
        %v983 = vadd.f32 %v927, %v971
        %v984 = vadd.f32 %v928, %v975
        %v985 = vadd.f32 %v929, %v967
        %v986 = vadd.f32 %v930, %v971
        %v987 = vadd.f32 %v931, %v975
        %v988 = vadd.f32 %v932, %v967
        %v989 = vadd.f32 %v933, %v971
        %v990 = vadd.f32 %v934, %v975
        %v991 = vadd.f32 %v935, %v967
        %v992 = vadd.f32 %v936, %v971
        %v993 = vadd.f32 %v937, %v975
        %v994 = vadd.f32 %v938, %v967
        %v995 = vadd.f32 %v939, %v971
        %v996 = vadd.f32 %v940, %v975
        %v997 = vadd.f32 %v941, %v967
        %v998 = vadd.f32 %v942, %v971
        %v999 = vadd.f32 %v943, %v975
        %v1000 = vadd.f32 %v944, %v967
        %v1001 = vadd.f32 %v945, %v971
        %v1002 = vadd.f32 %v946, %v975
        %v1003 = vadd.f32 %v947, %v967
        %v1004 = vadd.f32 %v948, %v971
        %v1005 = vadd.f32 %v949, %v975
        %v1006 = vadd.f32 %v950, %v967
        %v1007 = vadd.f32 %v951, %v971
        %v1008 = vadd.f32 %v952, %v975
        %v1009 = vadd.f32 %v953, %v967
        %v1010 = vadd.f32 %v954, %v971
        %v1011 = vadd.f32 %v955, %v975
        %v1012 = vadd.f32 %v956, %v967
        %v1013 = vadd.f32 %v957, %v971
        %v1014 = vadd.f32 %v958, %v975
        %v1015 = vadd.f32 %v959, %v967
        %v1016 = vadd.f32 %v960, %v971
        %v1017 = vadd.f32 %v961, %v975
        %v1018 = vmul.f32 %v979, 0.5
        %v1019 = vmul.f32 %v980, 0.5
        %v1020 = vmul.f32 %v981, 0.5
        %v1021 = vmul.f32 %v982, 0.5
        %v1022 = vmul.f32 %v983, 0.5
        %v1023 = vmul.f32 %v984, 0.5
        %v1024 = vmul.f32 %v985, 0.5
        %v1025 = vmul.f32 %v986, 0.5
        %v1026 = vmul.f32 %v987, 0.5
        %v1027 = vmul.f32 %v988, 0.5
        %v1028 = vmul.f32 %v989, 0.5
        %v1029 = vmul.f32 %v990, 0.5
        %v1030 = vmul.f32 %v991, 0.5
        %v1031 = vmul.f32 %v992, 0.5
        %v1032 = vmul.f32 %v993, 0.5
        %v1033 = vmul.f32 %v994, 0.5
        %v1034 = vmul.f32 %v995, 0.5
        %v1035 = vmul.f32 %v996, 0.5
        %v1036 = vmul.f32 %v997, 0.5
        %v1037 = vmul.f32 %v998, 0.5
        %v1038 = vmul.f32 %v999, 0.5
        %v1039 = vmul.f32 %v1000, 0.5
        %v1040 = vmul.f32 %v1001, 0.5
        %v1041 = vmul.f32 %v1002, 0.5
        %v1042 = vmul.f32 %v1003, 0.5
        %v1043 = vmul.f32 %v1004, 0.5
        %v1044 = vmul.f32 %v1005, 0.5
        %v1045 = vmul.f32 %v1006, 0.5
        %v1046 = vmul.f32 %v1007, 0.5
        %v1047 = vmul.f32 %v1008, 0.5
        %v1048 = vmul.f32 %v1009, 0.5
        %v1049 = vmul.f32 %v1010, 0.5
        %v1050 = vmul.f32 %v1011, 0.5
        %v1051 = vmul.f32 %v1012, 0.5
        %v1052 = vmul.f32 %v1013, 0.5
        %v1053 = vmul.f32 %v1014, 0.5
        %v1054 = vmul.f32 %v1015, 0.5
        %v1055 = vmul.f32 %v1016, 0.5
        %v1056 = vmul.f32 %v1017, 0.5
        %v1057 = vtanh.pop %v1018
        %v1058 = vtanh.pop %v1019
        %v1059 = vtanh.pop %v1020
        %v1060 = vtanh.pop %v1021
        %v1061 = vtanh.pop %v1022
        %v1062 = vtanh.pop %v1023
        %v1063 = vtanh.pop %v1024
        %v1064 = vtanh.pop %v1025
        %v1065 = vtanh.pop %v1026
        %v1066 = vtanh.pop %v1027
        %v1067 = vtanh.pop %v1028
        %v1068 = vtanh.pop %v1029
        %v1069 = vtanh.pop %v1030
        %v1070 = vtanh.pop %v1031
        %v1071 = vtanh.pop %v1032
        %v1072 = vtanh.pop %v1033
        %v1073 = vtanh.pop %v1034
        %v1074 = vtanh.pop %v1035
        %v1075 = vtanh.pop %v1036
        %v1076 = vtanh.pop %v1037
        %v1077 = vtanh.pop %v1038
        %v1078 = vtanh.pop %v1039
        %v1079 = vtanh.pop %v1040
        %v1080 = vtanh.pop %v1041
        %v1081 = vtanh.pop %v1042
        %v1082 = vtanh.pop %v1043
        %v1083 = vtanh.pop %v1044
        %v1084 = vtanh.pop %v1045
        %v1085 = vtanh.pop %v1046
        %v1086 = vtanh.pop %v1047
        %v1087 = vtanh.pop %v1048
        %v1088 = vtanh.pop %v1049
        %v1089 = vtanh.pop %v1050
        %v1090 = vtanh.pop %v1051
        %v1091 = vtanh.pop %v1052
        %v1092 = vtanh.pop %v1053
        %v1093 = vtanh.pop %v1054
        %v1094 = vtanh.pop %v1055
        %v1095 = vtanh.pop %v1056
        %v1096 = vmul.f32 %v1057, 0.5
        %v1097 = vmul.f32 %v1058, 0.5
        %v1098 = vmul.f32 %v1059, 0.5
        %v1099 = vmul.f32 %v1060, 0.5
        %v1100 = vmul.f32 %v1061, 0.5
        %v1101 = vmul.f32 %v1062, 0.5
        %v1102 = vmul.f32 %v1063, 0.5
        %v1103 = vmul.f32 %v1064, 0.5
        %v1104 = vmul.f32 %v1065, 0.5
        %v1105 = vmul.f32 %v1066, 0.5
        %v1106 = vmul.f32 %v1067, 0.5
        %v1107 = vmul.f32 %v1068, 0.5
        %v1108 = vmul.f32 %v1069, 0.5
        %v1109 = vmul.f32 %v1070, 0.5
        %v1110 = vmul.f32 %v1071, 0.5
        %v1111 = vmul.f32 %v1072, 0.5
        %v1112 = vmul.f32 %v1073, 0.5
        %v1113 = vmul.f32 %v1074, 0.5
        %v1114 = vmul.f32 %v1075, 0.5
        %v1115 = vmul.f32 %v1076, 0.5
        %v1116 = vmul.f32 %v1077, 0.5
        %v1117 = vmul.f32 %v1078, 0.5
        %v1118 = vmul.f32 %v1079, 0.5
        %v1119 = vmul.f32 %v1080, 0.5
        %v1120 = vmul.f32 %v1081, 0.5
        %v1121 = vmul.f32 %v1082, 0.5
        %v1122 = vmul.f32 %v1083, 0.5
        %v1123 = vmul.f32 %v1084, 0.5
        %v1124 = vmul.f32 %v1085, 0.5
        %v1125 = vmul.f32 %v1086, 0.5
        %v1126 = vmul.f32 %v1087, 0.5
        %v1127 = vmul.f32 %v1088, 0.5
        %v1128 = vmul.f32 %v1089, 0.5
        %v1129 = vmul.f32 %v1090, 0.5
        %v1130 = vmul.f32 %v1091, 0.5
        %v1131 = vmul.f32 %v1092, 0.5
        %v1132 = vmul.f32 %v1093, 0.5
        %v1133 = vmul.f32 %v1094, 0.5
        %v1134 = vmul.f32 %v1095, 0.5
        %v1135 = vadd.f32 %v1096, 0.5
        %v1136 = vadd.f32 %v1097, 0.5
        %v1137 = vadd.f32 %v1098, 0.5
        %v1138 = vadd.f32 %v1099, 0.5
        %v1139 = vadd.f32 %v1100, 0.5
        %v1140 = vadd.f32 %v1101, 0.5
        %v1141 = vadd.f32 %v1102, 0.5
        %v1142 = vadd.f32 %v1103, 0.5
        %v1143 = vadd.f32 %v1104, 0.5
        %v1144 = vadd.f32 %v1105, 0.5
        %v1145 = vadd.f32 %v1106, 0.5
        %v1146 = vadd.f32 %v1107, 0.5
        %v1147 = vadd.f32 %v1108, 0.5
        %v1148 = vadd.f32 %v1109, 0.5
        %v1149 = vadd.f32 %v1110, 0.5
        %v1150 = vadd.f32 %v1111, 0.5
        %v1151 = vadd.f32 %v1112, 0.5
        %v1152 = vadd.f32 %v1113, 0.5
        %v1153 = vadd.f32 %v1114, 0.5
        %v1154 = vadd.f32 %v1115, 0.5
        %v1155 = vadd.f32 %v1116, 0.5
        %v1156 = vadd.f32 %v1117, 0.5
        %v1157 = vadd.f32 %v1118, 0.5
        %v1158 = vadd.f32 %v1119, 0.5
        %v1159 = vadd.f32 %v1120, 0.5
        %v1160 = vadd.f32 %v1121, 0.5
        %v1161 = vadd.f32 %v1122, 0.5
        %v1162 = vadd.f32 %v1123, 0.5
        %v1163 = vadd.f32 %v1124, 0.5
        %v1164 = vadd.f32 %v1125, 0.5
        %v1165 = vadd.f32 %v1126, 0.5
        %v1166 = vadd.f32 %v1127, 0.5
        %v1167 = vadd.f32 %v1128, 0.5
        %v1168 = vadd.f32 %v1129, 0.5
        %v1169 = vadd.f32 %v1130, 0.5
        %v1170 = vadd.f32 %v1131, 0.5
        %v1171 = vadd.f32 %v1132, 0.5
        %v1172 = vadd.f32 %v1133, 0.5
        %v1173 = vadd.f32 %v1134, 0.5
        %v1174 = vld [vmem:[%s5] sm:$0x7]
        %v1175 = vstv %s341
        %v1177 = vlaneseq
        %v1178 = vshrl.u32 %v1177, 7
        %v1179 = vsub.s32 0, %v1178
        %v1180 = vrot.slane %v1174, %v1179
        %v1181 = vlaneseq
        %v1182 = vshrl.u32 %v1181, 7
        %v1183 = vsub.s32 1, %v1182
        %v1184 = vrot.slane %v1174, %v1183
        %v1185 = vlaneseq
        %v1186 = vshrl.u32 %v1185, 7
        %v1187 = vsub.s32 2, %v1186
        %v1188 = vrot.slane %v1174, %v1187
        %1192 = vmatprep.subr.mxu0 0.0
        %1193 = vmatpush1.xpose.msra.mxu0 0.0
        %1194 = vmatprep.subr.mxu0 0.0
        %1195 = vmatpush1.xpose.msra.mxu0 0.0
        %1196 = vmatprep.subr.mxu0 0.0
        %1197 = vmatpush1.xpose.msra.mxu0 0.0
        %1198 = vmatprep.subr.mxu0 %v1172
        %1199 = vmatpush1.xpose.msra.mxu0 %v1171
        %1200 = vmatprep.subr.mxu0 %v1169
        %1201 = vmatpush1.xpose.msra.mxu0 %v1168
        %1202 = vmatprep.subr.mxu0 %v1166
        %1203 = vmatpush1.xpose.msra.mxu0 %v1165
        %1204 = vmatprep.subr.mxu0 %v1163
        %1205 = vmatpush1.xpose.msra.mxu0 %v1162
        %1206 = vmatprep.subr.mxu0 %v1160
        %1207 = vmatpush1.xpose.msra.mxu0 %v1159
        %1208 = vmatprep.subr.mxu0 %v1157
        %1209 = vmatpush1.xpose.msra.mxu0 %v1156
        %1210 = vmatprep.subr.mxu0 %v1154
        %1211 = vmatpush1.xpose.msra.mxu0 %v1153
        %1212 = vmatprep.subr.mxu0 %v1151
        %1213 = vmatpush1.xpose.msra.mxu0 %v1150
        %1214 = vmatprep.subr.mxu0 %v1148
        %1215 = vmatpush1.xpose.msra.mxu0 %v1147
        %1216 = vmatprep.subr.mxu0 %v1145
        %1217 = vmatpush1.xpose.msra.mxu0 %v1144
        %1218 = vmatprep.subr.mxu0 %v1142
        %1219 = vmatpush1.xpose.msra.mxu0 %v1141
        %1220 = vmatprep.subr.mxu0 %v1139
        %1221 = vmatpush1.xpose.msra.mxu0 %v1138
        %1222 = vmatprep.subr.mxu0 %v1136
        %1223 = vmatpush1.xpose.msra.mxu0 %v1135
        %1224 = vmatprep.subr.mxu0 0.0
        %1225 = vmatpush2.xpose.msra.mxu0 0.0
        %1226 = vmatprep.subr.mxu0 0.0
        %1227 = vmatpush2.xpose.msra.mxu0 0.0
        %1228 = vmatprep.subr.mxu0 0.0
        %1229 = vmatpush2.xpose.msra.mxu0 0.0
        %1230 = vmatprep.subr.mxu0 0.0
        %1231 = vmatpush2.xpose.msra.mxu0 0.0
        %1232 = vmatprep.subr.mxu0 0.0
        %1233 = vmatpush2.xpose.msra.mxu0 0.0
        %1234 = vmatprep.subr.mxu0 0.0
        %1235 = vmatpush2.xpose.msra.mxu0 0.0
        %1236 = vmatprep.subr.mxu0 0.0
        %1237 = vmatpush2.xpose.msra.mxu0 0.0
        %1238 = vmatprep.subr.mxu0 0.0
        %1239 = vmatpush2.xpose.msra.mxu0 0.0
        %1240 = vmatprep.subr.mxu0 0.0
        %1241 = vmatpush2.xpose.msra.mxu0 0.0
        %1242 = vmatprep.subr.mxu0 0.0
        %1243 = vmatpush2.xpose.msra.mxu0 0.0
        %1244 = vmatprep.subr.mxu0 0.0
        %1245 = vmatpush2.xpose.msra.mxu0 0.0
        %1246 = vmatprep.subr.mxu0 0.0
        %1247 = vmatpush2.xpose.msra.mxu0 0.0
        %1248 = vmatprep.subr.mxu0 0.0
        %1249 = vmatpush2.xpose.msra.mxu0 0.0
        %1250 = vmatprep.subr.mxu0 0.0
        %1251 = vmatpush2.xpose.msra.mxu0 0.0
        %1252 = vmatprep.subr.mxu0 0.0
        %1253 = vmatpush2.xpose.msra.mxu0 0.0
        %1254 = vmatprep.subr.mxu0 0.0
        %1255 = vmatpush2.xpose.msra.mxu0 0.0
        %1256 = vmatprep.mubr.f32.mxu0 %v1184
        %1257 = vmatmul.mubr.f32.gmra.mxu0 %v1180
        %v1258 = vpop.f32.mrf.mxu0
        %v1259 = vadd.f32 %v1175, %v1258
        %v1260 = vpop.f32.mrf.mxu0
        %1261 = vdwg.mxu0
        %1262 = vmatprep.subr.mxu0 0.0
        %1263 = vmatpush1.xpose.msra.mxu0 0.0
        %1264 = vmatprep.subr.mxu0 0.0
        %1265 = vmatpush1.xpose.msra.mxu0 0.0
        %1266 = vmatprep.subr.mxu0 0.0
        %1267 = vmatpush1.xpose.msra.mxu0 0.0
        %1268 = vmatprep.subr.mxu0 0.0
        %1269 = vmatpush1.xpose.msra.mxu0 %v1173
        %1270 = vmatprep.subr.mxu0 0.0
        %1271 = vmatpush1.xpose.msra.mxu0 %v1170
        %1272 = vmatprep.subr.mxu0 0.0
        %1273 = vmatpush1.xpose.msra.mxu0 %v1167
        %1274 = vmatprep.subr.mxu0 0.0
        %1275 = vmatpush1.xpose.msra.mxu0 %v1164
        %1276 = vmatprep.subr.mxu0 0.0
        %1277 = vmatpush1.xpose.msra.mxu0 %v1161
        %1278 = vmatprep.subr.mxu0 0.0
        %1279 = vmatpush1.xpose.msra.mxu0 %v1158
        %1280 = vmatprep.subr.mxu0 0.0
        %1281 = vmatpush1.xpose.msra.mxu0 %v1155
        %1282 = vmatprep.subr.mxu0 0.0
        %1283 = vmatpush1.xpose.msra.mxu0 %v1152
        %1284 = vmatprep.subr.mxu0 0.0
        %1285 = vmatpush1.xpose.msra.mxu0 %v1149
        %1286 = vmatprep.subr.mxu0 0.0
        %1287 = vmatpush1.xpose.msra.mxu0 %v1146
        %1288 = vmatprep.subr.mxu0 0.0
        %1289 = vmatpush1.xpose.msra.mxu0 %v1143
        %1290 = vmatprep.subr.mxu0 0.0
        %1291 = vmatpush1.xpose.msra.mxu0 %v1140
        %1292 = vmatprep.subr.mxu0 0.0
        %1293 = vmatpush1.xpose.msra.mxu0 %v1137
        %1294 = vmatprep.subr.mxu0 0.0
        %1295 = vmatpush2.xpose.msra.mxu0 0.0
        %1296 = vmatprep.subr.mxu0 0.0
        %1297 = vmatpush2.xpose.msra.mxu0 0.0
        %1298 = vmatprep.subr.mxu0 0.0
        %1299 = vmatpush2.xpose.msra.mxu0 0.0
        %1300 = vmatprep.subr.mxu0 0.0
        %1301 = vmatpush2.xpose.msra.mxu0 0.0
        %1302 = vmatprep.subr.mxu0 0.0
        %1303 = vmatpush2.xpose.msra.mxu0 0.0
        %1304 = vmatprep.subr.mxu0 0.0
        %1305 = vmatpush2.xpose.msra.mxu0 0.0
        %1306 = vmatprep.subr.mxu0 0.0
        %1307 = vmatpush2.xpose.msra.mxu0 0.0
        %1308 = vmatprep.subr.mxu0 0.0
        %1309 = vmatpush2.xpose.msra.mxu0 0.0
        %1310 = vmatprep.subr.mxu0 0.0
        %1311 = vmatpush2.xpose.msra.mxu0 0.0
        %1312 = vmatprep.subr.mxu0 0.0
        %1313 = vmatpush2.xpose.msra.mxu0 0.0
        %1314 = vmatprep.subr.mxu0 0.0
        %1315 = vmatpush2.xpose.msra.mxu0 0.0
        %1316 = vmatprep.subr.mxu0 0.0
        %1317 = vmatpush2.xpose.msra.mxu0 0.0
        %1318 = vmatprep.subr.mxu0 0.0
        %1319 = vmatpush2.xpose.msra.mxu0 0.0
        %1320 = vmatprep.subr.mxu0 0.0
        %1321 = vmatpush2.xpose.msra.mxu0 0.0
        %1322 = vmatprep.subr.mxu0 0.0
        %1323 = vmatpush2.xpose.msra.mxu0 0.0
        %1324 = vmatprep.subr.mxu0 0.0
        %1325 = vmatpush2.xpose.msra.mxu0 0.0
        %1326 = vmatprep.mubr.f32.mxu0 0.0
        %1327 = vmatmul.mubr.f32.gmra.mxu0 %v1188
        %v1328 = vpop.f32.mrf.mxu0
        %v1329 = vadd.f32 %v1259, %v1328
        %v1330 = vpop.f32.mrf.mxu0
        %1331 = vdwg.mxu0
        %vm1332 = vcmask 843776
        %1333 = vst.msk [vmem:[%s312] sm:$0x1] %vm1332, %v1329
        %s1334 = sand.u32 %s187, 1
        %s1335 = scalar_lea.sflag [#allocation4], %s1334
        %s1336 = sand.u32 %s187, 1
        %s1337 = scalar_lea.vmem [#allocation3], %s1336
        // Predicated region
        $region49: #{tpu_custom_call.1} parent=47 // pred_check
          %p1338 = pneg %p197
        $region50: #{tpu_custom_call.1} parent=47 // pred_check_branch
          %1340 = sbr.rel (%p1338) target = $region52
        $region51: #{tpu_custom_call.1} parent=47 // pred_region
          %s1342 = ssub.s32 16, 16
          %1343 = vsyncadd %s1335, %s1342
          %s1344 = smul.addr %s22, 16
          %s1345 = scalar_lea.hbm %s7, %s1344
          %s1347 = sshll.u32 %s1337, 4
          %s1348 = int_to_ptr.vmem [resolvable:$true] %s1347
          %1350 = dma.vmem_to_hbm [thread:$0]  %s1348, 16, %s1345, %s1335
        $region52: #{tpu_custom_call.1} parent=47 // pred_fallthru
          _
      $region48: #{tpu_custom_call.1} parent=5 // pred_fallthru
        _
      %p1351 = scmp.le.s32.totalorder 2, %s17
      // Predicated region
      $region53: #{tpu_custom_call.1} parent=5 // pred_check
        %p1352 = pneg %p1351
      $region54: #{tpu_custom_call.1} parent=5 // pred_check_branch
        %1354 = sbr.rel (%p1352) target = $region56
      $region55: #{tpu_custom_call.1} parent=5 // pred_region
        %s1355 = ssub.s32 %s17, 2
        // Predicated region
        $region57: #{tpu_custom_call.1} parent=55 // pred_check
          %p1356 = pneg %p203
        $region58: #{tpu_custom_call.1} parent=55 // pred_check_branch
          %1358 = sbr.rel (%p1356) target = $region60
        $region59: #{tpu_custom_call.1} parent=55 // pred_region
          %s1359 = sand.u32 %s188, 1
          %s1360 = scalar_lea.sflag [#allocation4], %s1359
          %s1361 = sand.u32 %s188, 1
          %s1362 = scalar_lea.vmem [#allocation3], %s1361
          %1363 = dma.done %s1360, 16
        $region60: #{tpu_custom_call.1} parent=55 // pred_fallthru
          _
      $region56: #{tpu_custom_call.1} parent=5 // pred_fallthru
        _
    $region6: #{tpu_custom_call.1} parent=1 // loop_footer
      %s21 = sadd.s32 1, %s17
    $region7: #{tpu_custom_call.1} parent=1 // loop_footer_branch
      %16 = sbr.rel target = $region3
    $region8: #{tpu_custom_call.1} parent=1 // loop_exit
      _
    %1364 = vsyncpa [#allocation4], 1
    %s1365 = scalar_lea.sflag [#allocation4], 1
    %1366 = vsyncpa %s1365, 1

</llo_original>
